<compile_context>
chip_gen: v7x
topology: tpu7x:2x2x1
jax: 0.10.0
libtpu: 0.0.40
codegen_flags: <defaults>
</compile_context>

<pallas_src>
import functools

import jax
import jax.numpy as jnp
from jax.experimental import pallas as pl
from jax.experimental.pallas import tpu as pltpu


def _collapsed_affine_kernel(x_ref, w_ref, b_ref, o_ref):
    """One grid step:  o[1, tile_b] = w[1, d_in] @ x[tile_b, d_in]^T + b  (f32 accum)."""
    # Contract the lane (d_in) axis of both operands so the result is lane-dense
    # (1, tile_b) — wide unmasked stores on the output path.
    acc = jax.lax.dot_general(
        w_ref[...], x_ref[...],
        dimension_numbers=(((1,), (1,)), ((), ())),
        preferred_element_type=jnp.float32,
    )                                            # (1, tile_b), f32 accumulation on MXU
    res = acc + b_ref[0]                         # scalar bias from SMEM
    o_ref[0] = res.astype(o_ref.dtype)           # o_ref block is (1, 1, tile_b)


def collapse_params(params):
    """One-off (model-load-time) fold of the 5 activation-free Linears into one affine map.

    params: list of (W [out, in], b [out]) in PyTorch nn.Linear layout.
    Returns (w_row [1, d_in] f32, bias [1] f32) such that  y = x @ w_row.T + bias.
    Collapsing in f32 is mathematically exact for eval (dropout = identity) but not
    bit-identical to the layer-by-layer chain (different associativity).
    """
    w0, b0 = params[0]
    w_comb = jnp.asarray(w0, jnp.float32).T          # [d_in, 1024]
    b_comb = jnp.asarray(b0, jnp.float32)            # [1024]
    for w, b in params[1:]:
        w_t = jnp.asarray(w, jnp.float32).T          # [in, out]
        w_comb = w_comb @ w_t
        b_comb = b_comb @ w_t + jnp.asarray(b, jnp.float32)
    return w_comb.T, b_comb                          # [1, d_in], [1]


def _cdiv(a, b):
    return -(-a // b)


def _round_up(v, m):
    return _cdiv(v, m) * m


def _choose_tile_b(batch, d_in, itemsize):
    """Pick a batch tile: ~6 MiB of x per grid step, multiple of 128, >= 2 grid steps."""
    target_bytes = 6 << 20
    tile = (target_bytes // (d_in * itemsize)) // 128 * 128
    tile = max(128, min(8192, tile))
    # Don't make the tile bigger than ~half the batch (rounded up to 128) so small
    # batches still produce at least two grid steps (v7x has 2 TensorCores).
    tile = min(tile, max(128, _round_up(_cdiv(batch, 2), 128)))
    return int(tile)


@functools.partial(jax.jit, static_argnames=("tile_b",))
def aesthetic_predictor(x, w_row, bias, *, tile_b=None):
    """x: [B, d_in] (f32 or bf16 — computed in x's dtype, f32 MXU accumulation).

    w_row: [1, d_in] f32, bias: [1] f32 — the pre-collapsed affine map from
    collapse_params() (computed once at model-load time, NOT per call).
    Returns [B, 1] f32 aesthetic scores.
    """
    B, d_in = x.shape
    itemsize = jnp.dtype(x.dtype).itemsize
    if tile_b is None:
        tile_b = _choose_tile_b(B, d_in, itemsize)
    assert tile_b % 8 == 0, "tile_b must be a multiple of 8 (sublane tiling)"
    if itemsize < 4:
        assert tile_b % 16 == 0, "tile_b must be a multiple of 16 for sub-32-bit dtypes"

    num_tiles = pl.cdiv(B, tile_b)

    # Collapsed weight in the compute dtype (tiny [1, d_in] cast); bias stays f32 in SMEM.
    w_row_c = w_row.astype(x.dtype)
    bias_f32 = bias.astype(jnp.float32)

    # VMEM budget: double-buffered x block + weight + outputs + slack.  Explicit limit
    # covers v5e's 16 MiB scoped default; capped at 64 MiB (v7x physical VMEM).
    x_block_bytes = tile_b * d_in * itemsize
    vmem_need = 2 * x_block_bytes + 2 * d_in * itemsize + 4 * tile_b * 4 + (4 << 20)
    vmem_limit = int(min(64 << 20, max(32 << 20, vmem_need)))

    out_tiled = pl.pallas_call(
        _collapsed_affine_kernel,
        out_shape=jax.ShapeDtypeStruct((num_tiles, 1, tile_b), jnp.float32),
        grid_spec=pltpu.PrefetchScalarGridSpec(
            num_scalar_prefetch=0,
            grid=(num_tiles,),
            in_specs=[
                # Batch tile of x: the only HBM stream that matters.  The last block may
                # be ragged (B not a multiple of tile_b); garbage rows only affect output
                # slots that are sliced away below.  Default double-buffering is enough
                # here; bump to pipeline_mode=pl.Buffered(3) only if DMA latency shows.
                pl.BlockSpec((tile_b, d_in), lambda i: (i, 0)),
                # Collapsed weight row: constant block -> fetched once, stays resident.
                pl.BlockSpec((1, d_in), lambda i: (0, 0)),
                # Combined scalar bias lives in SMEM.
                pl.BlockSpec(memory_space=pltpu.MemorySpace.SMEM),
            ],
            # Lane-dense output: one (1, 1, tile_b) row per grid step (wide stores).
            out_specs=pl.BlockSpec((1, 1, tile_b), lambda i: (i, 0, 0)),
        ),
        compiler_params=pltpu.CompilerParams(
            # Batch tiles are independent -> shard across TensorCores (v7x megacore).
            dimension_semantics=("parallel",),
            vmem_limit_bytes=vmem_limit,
        ),
    )(x, w_row_c, bias_f32)

    # (num_tiles, 1, tile_b) -> (num_tiles*tile_b, 1) -> strip the ragged tail.
    return out_tiled.reshape(num_tiles * tile_b, 1)[:B]


def init_params(key, input_size):
    """Deterministic synthetic init matching nn.Linear shapes: W [out, in], b [out]."""
    dims = [input_size, 1024, 128, 64, 16, 1]
    params = []
    for i in range(len(dims) - 1):
        d_in, d_out = dims[i], dims[i + 1]
        key, kw, kb = jax.random.split(key, 3)
        bound = 1.0 / jnp.sqrt(d_in)
        w = jax.random.uniform(kw, (d_out, d_in), jnp.float32, -bound, bound)
        b = jax.random.uniform(kb, (d_out,), jnp.float32, -bound, bound)
        params.append((w, b))
    return params


def reference_forward(x, params):
    """Pure-JAX 5-layer chain reference (dropout = identity in eval)."""
    h = x
    for w, b in params:
        h = h @ w.T + b
    return h


if __name__ == "__main__":
    key = jax.random.PRNGKey(0)
    kx, kp = jax.random.split(key)

    INPUT_SIZE = 256   # small synthetic embedding dim (real CLIP model uses 768)
    BATCH = 200        # deliberately NOT a multiple of tile_b -> exercises the ragged tail

    x = jax.random.normal(kx, (BATCH, INPUT_SIZE), jnp.float32)
    params = init_params(kp, INPUT_SIZE)

    # One-off, model-load-time collapse (outside the per-inference call path).
    w_row, bias = collapse_params(params)

    ref = reference_forward(x, params)

    # f32 path (auto tile_b -> 128 here, giving 2 grid steps with a ragged last block).
    out = aesthetic_predictor(x, w_row, bias)
    out = jax.block_until_ready(out)
    assert out.shape == (BATCH, 1)
    assert jnp.allclose(out, ref, atol=5e-3, rtol=5e-3), "f32 kernel mismatch vs reference"

    # bf16 path: x arrives already in bf16 (no wrapper-side cast inside the predictor);
    # f32 MXU accumulation is kept.  Recommended mode on v6e / v7x when upstream emits bf16.
    x_bf16 = x.astype(jnp.bfloat16)
    out_bf16 = aesthetic_predictor(x_bf16, w_row, bias)
    out_bf16 = jax.block_until_ready(out_bf16)
    assert out_bf16.shape == (BATCH, 1)
    assert jnp.allclose(out_bf16, ref, atol=2e-2, rtol=2e-2), "bf16 kernel mismatch vs reference"

    print("KERNEL_OK")
</pallas_src>

<mosaic_0001>
module attributes {stable_mosaic.version = 11 : i64} {
  func.func @_collapsed_affine_kernel(%arg0: i32, %arg1: memref<128x256xf32, #tpu.memory_space<vmem>>, %arg2: memref<1x256xf32, #tpu.memory_space<vmem>>, %arg3: memref<1xf32, #tpu.memory_space<smem>>, %arg4: memref<1x1x128xf32, #tpu.memory_space<vmem>>) attributes {dimension_semantics = [#tpu.dimension_semantics<parallel>], iteration_bounds = array<i64: 2>, scalar_prefetch = 0 : i64, scratch_operands = 0 : i64, tpu.core_type = #tpu.core_type<tc>, window_params = [{transform_indices = @transform_0, window_bounds = array<i64: 128, 256>}, {pipeline_mode = #tpu.pipeline_mode<synchronous>, transform_indices = @transform_1, window_bounds = array<i64: 1, 256>}, {transform_indices = @transform_2, window_bounds = array<i64: 1>}, {transform_indices = @transform_3, window_bounds = array<i64: 1, 1, 128>}]} {
    %c0 = arith.constant 0 : index
    %c0_0 = arith.constant 0 : index
    %0 = vector.load %arg2[%c0, %c0_0] : memref<1x256xf32, #tpu.memory_space<vmem>>, vector<1x256xf32>
    %c0_1 = arith.constant 0 : index
    %c0_2 = arith.constant 0 : index
    %1 = vector.load %arg1[%c0_1, %c0_2] : memref<128x256xf32, #tpu.memory_space<vmem>>, vector<128x256xf32>
    %cst = arith.constant dense<0.000000e+00> : vector<1x128xf32>
    %2 = tpu.matmul %0, %1, %cst {dimension_numbers = #tpu.dot_dimension_numbers<[1], [1], [0], [0], [0, 0, 1, 0], [], []>} : vector<1x256xf32>, vector<128x256xf32>, vector<1x128xf32> -> vector<1x128xf32>
    %c0_3 = arith.constant 0 : index
    %3 = memref.load %arg3[%c0_3] : memref<1xf32, #tpu.memory_space<smem>>
    %4 = vector.broadcast %3 : f32 to vector<1x128xf32>
    %5 = arith.addf %2, %4 : vector<1x128xf32>
    %c0_4 = arith.constant 0 : index
    %c0_5 = arith.constant 0 : index
    %c0_6 = arith.constant 0 : index
    %6 = vector.load %arg4[%c0_4, %c0_5, %c0_6] : memref<1x1x128xf32, #tpu.memory_space<vmem>>, vector<1x1x128xf32>
    %7 = vector.shape_cast %6 : vector<1x1x128xf32> to vector<1x128xf32>
    %8 = vector.shape_cast %5 : vector<1x128xf32> to vector<1x1x128xf32>
    tpu.vector_store %arg4[%c0_4, %c0_5, %c0_6], %8 {strides = array<i32>} : memref<1x1x128xf32, #tpu.memory_space<vmem>>, vector<1x1x128xf32>,
    return
  }
  func.func @transform_0(%arg0: i32) -> (i32, i32) {
    %c0_i32 = arith.constant 0 : i32
    %c0_i32_0 = arith.constant 0 : i32
    return %arg0, %c0_i32 : i32, i32
  }
  func.func @transform_1(%arg0: i32) -> (i32, i32) {
    %c0_i32 = arith.constant 0 : i32
    %c0_i32_0 = arith.constant 0 : i32
    %c0_i32_1 = arith.constant 0 : i32
    return %c0_i32, %c0_i32_0 : i32, i32
  }
  func.func @transform_2(%arg0: i32) -> i32 {
    %c0_i32 = arith.constant 0 : i32
    %c0_i32_0 = arith.constant 0 : i32
    return %c0_i32 : i32
  }
  func.func @transform_3(%arg0: i32) -> (i32, i32, i32) {
    %c0_i32 = arith.constant 0 : i32
    %c0_i32_0 = arith.constant 0 : i32
    %c0_i32_1 = arith.constant 0 : i32
    return %arg0, %c0_i32, %c0_i32_0 : i32, i32, i32
  }
}

</mosaic_0001>

<llo_original>
// kernel: aesthetic_predictor.1
$region0: #{aesthetic_predictor.1}
  #allocation0 [shape = 'u32[]', space=smem, size = 0x4, offset = 0x4, fixed_abs, tag = 'smem constant byte address 0x4 - core index']
  #allocation1 [shape = 'u32[144,128]{1,0:T(1,128)}', space=vmem, size = 0x12000, scoped, tag = 'internal scratch']
  #allocation2 [shape = 'f32[1]{0:T(128)S(6)}', space=smem, size = 0x200, scoped, tag = 'scoped memory for aesthetic_predictor.1']
  %s0 = inlined_call_operand.hbm [shape: f32[200,256], index: 0, kind: input, shape index: {}]
  %s1 = inlined_call_operand.vmem [shape: f32[1,256], index: 1, kind: input, shape index: {}]
  %s2 = inlined_call_operand.<no memory space> [shape: f32[1], index: 2, kind: input, shape index: {}]
  %s3 = inlined_call_operand.hbm [shape: f32[2,1,128], index: 3, kind: output, shape index: {}]
  %s4 = sld [smem:[#allocation0]]
  $region49: #{aesthetic_predictor.1} parent=0
    _
  %s6 = ssub.s32 1, %s4
  %s7 = scalar_select 0, %s6, %s4
  %8 = sst [smem:[#allocation2]] %s2
  $region1: #{aesthetic_predictor.1} parent=0
    #allocation3 [shape = 'u8[262144]{0}', space=vmem, size = 0x40000, scoped, tag = 'input window, operand 0']
    #allocation4 [shape = 's32[2]{0}', space=sflag, size = 0x8, scoped, tag = 'scoped memory for aesthetic_predictor.1']
    #allocation5 [shape = 's32[2]{0}', space=sflag, size = 0x8, scoped, tag = 'scoped memory for aesthetic_predictor.1']
    #allocation6 [shape = 'u8[1024]{0}', space=vmem, size = 0x400, scoped, tag = 'output window, operand 0']
    %9 = vsyncpa [#allocation4], 0
    %s10 = scalar_lea.sflag [#allocation4], 1
    %11 = vsyncpa %s10, 0
    %12 = vsyncpa [#allocation5], 0
    %s13 = scalar_lea.sflag [#allocation5], 1
    %14 = vsyncpa %s13, 0
    loop: start=0, step=1, limit=4
    $region2: #{aesthetic_predictor.1} parent=1 // loop_pre_header
      _
    $region3: #{aesthetic_predictor.1} parent=1 // loop_header
      %s16 = sphi 0, %s20
      %p17 = scmp.ge.s32.totalorder %s16, 4
      %s26 = sphi 0, %s28
      %s29 = sphi 0, %s26
      %s30 = sphi 0, %s29
      %s46 = sphi 0, %s30
      %s50 = sphi 0, %s50
      %s52 = sphi 0, %s50
      %s53 = sphi 0, %s52
      %s67 = sphi 0, %s53
      %s71 = sphi 0, %s71
      %s73 = sphi 0, %s71
      %s74 = sphi 0, %s73
      %s88 = sphi 0, %s74
      %s94 = sphi 0, %s96
      %s97 = sphi 0, %s94
      %s98 = sphi 0, %s97
      %s114 = sphi 0, %s98
    $region4: #{aesthetic_predictor.1} parent=1 // loop_header_branch
      %19 = sbr.rel (%p17) target = $region8
    $region5: #{aesthetic_predictor.1} parent=1 // loop_body
      %s21 = ssub.s32 %s16, 1
      %s22 = ssub.s32 %s16, 2
      %s23 = sadd.s32 %s16, 1
      %s24 = ssub.s32 %s16, %s23
      %p25 = scmp.eq.s32.totalorder %s24, 0
      %s27 = sadd.s32 %s26, 1
      %s28 = scalar_select %p25, %s26, %s27
      %p31 = pneg %p25
      %p32 = scmp.eq.s32.totalorder %s16, 1
      %p33 = por %p31, %p32
      %p34 = scmp.ne.s32.totalorder %s26, %s29
      %p35 = scmp.eq.s32.totalorder %s16, 0
      %p36 = por %p34, %p35
      %p37 = scmp.ne.s32.totalorder %s26, %s29
      %p38 = scmp.eq.s32.totalorder %s21, 1
      %p39 = por %p37, %p38
      %p40 = scmp.ne.s32.totalorder %s29, %s30
      %p41 = scmp.eq.s32.totalorder %s21, 0
      %p42 = por %p40, %p41
      %p43 = scmp.ne.s32.totalorder %s29, %s30
      %p44 = scmp.eq.s32.totalorder %s22, 1
      %p45 = por %p43, %p44
      %p47 = scmp.ne.s32.totalorder %s30, %s46
      %p48 = scmp.eq.s32.totalorder %s22, 0
      %p49 = por %p47, %p48
      %s51 = sadd.s32 %s50, 1
      %p54 = scmp.eq.s32.totalorder %s16, 1
      %p55 = scmp.ne.s32.totalorder %s50, %s52
      %p56 = scmp.eq.s32.totalorder %s16, 0
      %p57 = por %p55, %p56
      %p58 = scmp.ne.s32.totalorder %s50, %s52
      %p59 = scmp.eq.s32.totalorder %s21, 1
      %p60 = por %p58, %p59
      %p61 = scmp.ne.s32.totalorder %s52, %s53
      %p62 = scmp.eq.s32.totalorder %s21, 0
      %p63 = por %p61, %p62
      %p64 = scmp.ne.s32.totalorder %s52, %s53
      %p65 = scmp.eq.s32.totalorder %s22, 1
      %p66 = por %p64, %p65
      %p68 = scmp.ne.s32.totalorder %s53, %s67
      %p69 = scmp.eq.s32.totalorder %s22, 0
      %p70 = por %p68, %p69
      %s72 = sadd.s32 %s71, 1
      %p75 = scmp.eq.s32.totalorder %s16, 1
      %p76 = scmp.ne.s32.totalorder %s71, %s73
      %p77 = scmp.eq.s32.totalorder %s16, 0
      %p78 = por %p76, %p77
      %p79 = scmp.ne.s32.totalorder %s71, %s73
      %p80 = scmp.eq.s32.totalorder %s21, 1
      %p81 = por %p79, %p80
      %p82 = scmp.ne.s32.totalorder %s73, %s74
      %p83 = scmp.eq.s32.totalorder %s21, 0
      %p84 = por %p82, %p83
      %p85 = scmp.ne.s32.totalorder %s73, %s74
      %p86 = scmp.eq.s32.totalorder %s22, 1
      %p87 = por %p85, %p86
      %p89 = scmp.ne.s32.totalorder %s74, %s88
      %p90 = scmp.eq.s32.totalorder %s22, 0
      %p91 = por %p89, %p90
      %s92 = ssub.s32 %s16, %s23
      %p93 = scmp.eq.s32.totalorder %s92, 0
      %s95 = sadd.s32 %s94, 1
      %s96 = scalar_select %p93, %s94, %s95
      %p99 = pneg %p93
      %p100 = scmp.eq.s32.totalorder %s16, 1
      %p101 = por %p99, %p100
      %p102 = scmp.ne.s32.totalorder %s94, %s97
      %p103 = scmp.eq.s32.totalorder %s16, 0
      %p104 = por %p102, %p103
      %p105 = scmp.ne.s32.totalorder %s94, %s97
      %p106 = scmp.eq.s32.totalorder %s21, 1
      %p107 = por %p105, %p106
      %p108 = scmp.ne.s32.totalorder %s97, %s98
      %p109 = scmp.eq.s32.totalorder %s21, 0
      %p110 = por %p108, %p109
      %p111 = scmp.ne.s32.totalorder %s97, %s98
      %p112 = scmp.eq.s32.totalorder %s22, 1
      %p113 = por %p111, %p112
      %p115 = scmp.ne.s32.totalorder %s98, %s114
      %p116 = scmp.eq.s32.totalorder %s22, 0
      %p117 = por %p115, %p116
      %p118 = scmp.le.s32.totalorder 1, %s16
      %p119 = scmp.lt.s32.totalorder %s16, 3
      %p120 = pnand %p118, %p119
      %p121 = pneg %p120
      // Predicated region
      $region9: #{aesthetic_predictor.1} parent=5 // pred_check
        _
      $region10: #{aesthetic_predictor.1} parent=5 // pred_check_branch
        %123 = sbr.rel (%p120) target = $region12
      $region11: #{aesthetic_predictor.1} parent=5 // pred_region
        %s124 = ssub.s32 %s16, 1
        // Predicated region
        $region13: #{aesthetic_predictor.1} parent=11 // pred_check
          %p125 = pneg %p63
        $region14: #{aesthetic_predictor.1} parent=11 // pred_check_branch
          %127 = sbr.rel (%p125) target = $region16
        $region15: #{aesthetic_predictor.1} parent=11 // pred_region
          _
        $region16: #{aesthetic_predictor.1} parent=11 // pred_fallthru
          _
        // Predicated region
        $region17: #{aesthetic_predictor.1} parent=11 // pred_check
          %p128 = pneg %p84
        $region18: #{aesthetic_predictor.1} parent=11 // pred_check_branch
          %130 = sbr.rel (%p128) target = $region20
        $region19: #{aesthetic_predictor.1} parent=11 // pred_region
          _
        $region20: #{aesthetic_predictor.1} parent=11 // pred_fallthru
          _
      $region12: #{aesthetic_predictor.1} parent=5 // pred_fallthru
        _
      %p131 = scmp.lt.s32.totalorder %s16, 2
      // Predicated region
      $region21: #{aesthetic_predictor.1} parent=5 // pred_check
        %p132 = pneg %p131
      $region22: #{aesthetic_predictor.1} parent=5 // pred_check_branch
        %134 = sbr.rel (%p132) target = $region24
      $region23: #{aesthetic_predictor.1} parent=5 // pred_region
        // Predicated region
        $region25: #{aesthetic_predictor.1} parent=23 // pred_check
          %p135 = pneg %p36
        $region26: #{aesthetic_predictor.1} parent=23 // pred_check_branch
          %137 = sbr.rel (%p135) target = $region28
        $region27: #{aesthetic_predictor.1} parent=23 // pred_region
          %s138 = sand.u32 %s26, 1
          %s139 = scalar_lea.sflag [#allocation4], %s138
          %s140 = sand.u32 %s26, 1
          %s141 = smul.addr %s140, 256
          %s142 = scalar_lea.vmem [#allocation3], %s141
          %s143 = smul.u32 16, %s16
          %s144 = ssub.s32 25, %s143
          %p145 = scmp.lt.s32.totalorder %s144, 16
          %s146 = scalar_select %p145, %s144, 16
          %s147 = smul.u32 128, %s146
          %s148 = smul.u32 %s147, 2
          %s150 = ssub.s32 4096, %s148
          %151 = vsyncadd %s139, %s150
          %p152 = scmp.ne.s32.totalorder 0, %s148
          %s153 = smul.addr %s143, 2
          %s154 = smul.addr %s153, 128
          %s155 = scalar_lea.hbm %s0, %s154
          %s156 = smul.u32 16, %s146
          %s157 = sshll.u32 %s142, 4
          %s158 = int_to_ptr.vmem [resolvable:$true] %s157
          %s159 = sshll.u32 %s156, 4
          %163 = dma.hbm_to_vmem [thread:$0]  (%p152), %s155, %s159, %s158, %s139, 256, 256, 16
        $region28: #{aesthetic_predictor.1} parent=23 // pred_fallthru
          _
      $region24: #{aesthetic_predictor.1} parent=5 // pred_fallthru
        _
      %p164 = scmp.le.s32.totalorder 1, %s16
      %p165 = scmp.lt.s32.totalorder %s16, 3
      %p166 = pnand %p164, %p165
      %p167 = pneg %p166
      // Predicated region
      $region29: #{aesthetic_predictor.1} parent=5 // pred_check
        _
      $region30: #{aesthetic_predictor.1} parent=5 // pred_check_branch
        %169 = sbr.rel (%p166) target = $region32
      $region31: #{aesthetic_predictor.1} parent=5 // pred_region
        %s170 = ssub.s32 %s16, 1
        %s171 = sand.u32 %s29, 1
        %s172 = scalar_lea.sflag [#allocation4], %s171
        %s173 = sand.u32 %s29, 1
        %s174 = smul.addr %s173, 256
        %s175 = scalar_lea.vmem [#allocation3], %s174
        // Predicated region
        $region33: #{aesthetic_predictor.1} parent=31 // pred_check
          %p176 = pneg %p42
        $region34: #{aesthetic_predictor.1} parent=31 // pred_check_branch
          %178 = sbr.rel (%p176) target = $region36
        $region35: #{aesthetic_predictor.1} parent=31 // pred_region
          %179 = dma.done %s172, 4096
        $region36: #{aesthetic_predictor.1} parent=31 // pred_fallthru
          _
        %s180 = sand.u32 %s29, 1
        %s181 = scalar_lea.sflag [#allocation4], %s180
        %s182 = sand.u32 %s29, 1
        %s183 = smul.addr %s182, 256
        %s184 = scalar_lea.vmem [#allocation3], %s183
        %p185 = pneg %p42
        %p186 = pneg %p39
        %p187 = pneg %p63
        %p188 = pneg %p60
        %p189 = pneg %p84
        %p190 = pneg %p81
        %p191 = pneg %p110
        %p192 = pneg %p107
        %s193 = sand.u32 %s97, 1
        %s194 = scalar_lea.sflag [#allocation5], %s193
        %s195 = sand.u32 %s97, 1
        %s196 = scalar_lea.vmem [#allocation6], %s195
        %s197 = smul.u32 16, %s21
        %s198 = ssub.s32 25, %s197
        %p199 = scmp.lt.s32.totalorder %s198, 16
        %s200 = scalar_select %p199, %s198, 16
        %s201 = smul.u32 128, %s200
        %s202 = smul.u32 %s201, 2
        %v203 = vld [vmem:[%s1] sm:$0x3]
        %v204 = vld [vmem:[%s175] sm:$0xff]
        %v205 = vld [vmem:[%s175 + $0x8] sm:$0xff]
        %v206 = vld [vmem:[%s175 + $0x10] sm:$0xff]
        %v207 = vld [vmem:[%s175 + $0x18] sm:$0xff]
        %v208 = vld [vmem:[%s175 + $0x20] sm:$0xff]
        %v209 = vld [vmem:[%s175 + $0x28] sm:$0xff]
        %v210 = vld [vmem:[%s175 + $0x30] sm:$0xff]
        %v211 = vld [vmem:[%s175 + $0x38] sm:$0xff]
        %v212 = vld [vmem:[%s175 + $0x40] sm:$0xff]
        %v213 = vld [vmem:[%s175 + $0x48] sm:$0xff]
        %v214 = vld [vmem:[%s175 + $0x50] sm:$0xff]
        %v215 = vld [vmem:[%s175 + $0x58] sm:$0xff]
        %v216 = vld [vmem:[%s175 + $0x60] sm:$0xff]
        %v217 = vld [vmem:[%s175 + $0x68] sm:$0xff]
        %v218 = vld [vmem:[%s175 + $0x70] sm:$0xff]
        %v219 = vld [vmem:[%s175 + $0x78] sm:$0xff]
        %v220 = vld [vmem:[%s175 + $0x80] sm:$0xff]
        %v221 = vld [vmem:[%s175 + $0x88] sm:$0xff]
        %v222 = vld [vmem:[%s175 + $0x90] sm:$0xff]
        %v223 = vld [vmem:[%s175 + $0x98] sm:$0xff]
        %v224 = vld [vmem:[%s175 + $0xa0] sm:$0xff]
        %v225 = vld [vmem:[%s175 + $0xa8] sm:$0xff]
        %v226 = vld [vmem:[%s175 + $0xb0] sm:$0xff]
        %v227 = vld [vmem:[%s175 + $0xb8] sm:$0xff]
        %v228 = vld [vmem:[%s175 + $0xc0] sm:$0xff]
        %v229 = vld [vmem:[%s175 + $0xc8] sm:$0xff]
        %v230 = vld [vmem:[%s175 + $0xd0] sm:$0xff]
        %v231 = vld [vmem:[%s175 + $0xd8] sm:$0xff]
        %v232 = vld [vmem:[%s175 + $0xe0] sm:$0xff]
        %v233 = vld [vmem:[%s175 + $0xe8] sm:$0xff]
        %v234 = vld [vmem:[%s175 + $0xf0] sm:$0xff]
        %v235 = vld [vmem:[%s175 + $0xf8] sm:$0xff]
        %s236 = sld [smem:[#allocation2]]
        %v237 = vstv %s236
        %v239 = vlaneseq
        %v240 = vshrl.u32 %v239, 7
        %v241 = vsub.s32 0, %v240
        %v242 = vrot.slane %v203, %v241
        %v243 = vlaneseq
        %v244 = vshrl.u32 %v243, 7
        %v245 = vsub.s32 1, %v244
        %v246 = vrot.slane %v203, %v245
        %249 = vmatprep.subr.mxu0 %v205
        %250 = vmatpush1.xpose.msra.mxu0 %v204
        %251 = vmatprep.subr.mxu0 %v207
        %252 = vmatpush1.xpose.msra.mxu0 %v206
        %253 = vmatprep.subr.mxu0 %v209
        %254 = vmatpush1.xpose.msra.mxu0 %v208
        %255 = vmatprep.subr.mxu0 %v211
        %256 = vmatpush1.xpose.msra.mxu0 %v210
        %257 = vmatprep.subr.mxu0 %v213
        %258 = vmatpush1.xpose.msra.mxu0 %v212
        %259 = vmatprep.subr.mxu0 %v215
        %260 = vmatpush1.xpose.msra.mxu0 %v214
        %261 = vmatprep.subr.mxu0 %v217
        %262 = vmatpush1.xpose.msra.mxu0 %v216
        %263 = vmatprep.subr.mxu0 %v219
        %264 = vmatpush1.xpose.msra.mxu0 %v218
        %265 = vmatprep.subr.mxu0 %v221
        %266 = vmatpush1.xpose.msra.mxu0 %v220
        %267 = vmatprep.subr.mxu0 %v223
        %268 = vmatpush1.xpose.msra.mxu0 %v222
        %269 = vmatprep.subr.mxu0 %v225
        %270 = vmatpush1.xpose.msra.mxu0 %v224
        %271 = vmatprep.subr.mxu0 %v227
        %272 = vmatpush1.xpose.msra.mxu0 %v226
        %273 = vmatprep.subr.mxu0 %v229
        %274 = vmatpush1.xpose.msra.mxu0 %v228
        %275 = vmatprep.subr.mxu0 %v231
        %276 = vmatpush1.xpose.msra.mxu0 %v230
        %277 = vmatprep.subr.mxu0 %v233
        %278 = vmatpush1.xpose.msra.mxu0 %v232
        %279 = vmatprep.subr.mxu0 %v235
        %280 = vmatpush1.xpose.msra.mxu0 %v234
        %281 = vmatprep.subr.mxu0 0.0
        %282 = vmatpush1.xpose.msra.mxu0 0.0
        %283 = vmatprep.subr.mxu0 0.0
        %284 = vmatpush1.xpose.msra.mxu0 0.0
        %285 = vmatprep.subr.mxu0 0.0
        %286 = vmatpush1.xpose.msra.mxu0 0.0
        %287 = vmatprep.subr.mxu0 0.0
        %288 = vmatpush1.xpose.msra.mxu0 0.0
        %289 = vmatprep.subr.mxu0 0.0
        %290 = vmatpush1.xpose.msra.mxu0 0.0
        %291 = vmatprep.subr.mxu0 0.0
        %292 = vmatpush1.xpose.msra.mxu0 0.0
        %293 = vmatprep.subr.mxu0 0.0
        %294 = vmatpush1.xpose.msra.mxu0 0.0
        %295 = vmatprep.subr.mxu0 0.0
        %296 = vmatpush1.xpose.msra.mxu0 0.0
        %297 = vmatprep.subr.mxu0 0.0
        %298 = vmatpush1.xpose.msra.mxu0 0.0
        %299 = vmatprep.subr.mxu0 0.0
        %300 = vmatpush1.xpose.msra.mxu0 0.0
        %301 = vmatprep.subr.mxu0 0.0
        %302 = vmatpush1.xpose.msra.mxu0 0.0
        %303 = vmatprep.subr.mxu0 0.0
        %304 = vmatpush1.xpose.msra.mxu0 0.0
        %305 = vmatprep.subr.mxu0 0.0
        %306 = vmatpush1.xpose.msra.mxu0 0.0
        %307 = vmatprep.subr.mxu0 0.0
        %308 = vmatpush1.xpose.msra.mxu0 0.0
        %309 = vmatprep.subr.mxu0 0.0
        %310 = vmatpush1.xpose.msra.mxu0 0.0
        %311 = vmatprep.subr.mxu0 0.0
        %312 = vmatpush1.xpose.msra.mxu0 0.0
        %313 = vmatprep.mubr.f32.mxu0 %v246
        %314 = vmatmul.mubr.f32.gmra.mrb[0].mxu0 %v242
        %v315 = vpop.f32.mrb[0].mxu0
        %v316 = vadd.f32 %v237, %v315
        %v317 = vpop.f32.mrb[0].mxu0
        %318 = vdwg.mxu0
        %319 = vst [vmem:[%s196] sm:$0x1] %v316
        %s320 = sand.u32 %s97, 1
        %s321 = scalar_lea.sflag [#allocation5], %s320
        %s322 = sand.u32 %s97, 1
        %s323 = scalar_lea.vmem [#allocation6], %s322
        // Predicated region
        $region37: #{aesthetic_predictor.1} parent=31 // pred_check
          %p324 = pneg %p107
        $region38: #{aesthetic_predictor.1} parent=31 // pred_check_branch
          %326 = sbr.rel (%p324) target = $region40
        $region39: #{aesthetic_predictor.1} parent=31 // pred_region
          %s328 = ssub.s32 16, 16
          %329 = vsyncadd %s321, %s328
          %s330 = smul.addr %s21, 16
          %s331 = scalar_lea.hbm %s3, %s330
          %s333 = sshll.u32 %s323, 4
          %s334 = int_to_ptr.vmem [resolvable:$true] %s333
          %336 = dma.vmem_to_hbm [thread:$0]  %s334, 16, %s331, %s321
        $region40: #{aesthetic_predictor.1} parent=31 // pred_fallthru
          _
      $region32: #{aesthetic_predictor.1} parent=5 // pred_fallthru
        _
      %p337 = scmp.le.s32.totalorder 2, %s16
      // Predicated region
      $region41: #{aesthetic_predictor.1} parent=5 // pred_check
        %p338 = pneg %p337
      $region42: #{aesthetic_predictor.1} parent=5 // pred_check_branch
        %340 = sbr.rel (%p338) target = $region44
      $region43: #{aesthetic_predictor.1} parent=5 // pred_region
        %s341 = ssub.s32 %s16, 2
        // Predicated region
        $region45: #{aesthetic_predictor.1} parent=43 // pred_check
          %p342 = pneg %p113
        $region46: #{aesthetic_predictor.1} parent=43 // pred_check_branch
          %344 = sbr.rel (%p342) target = $region48
        $region47: #{aesthetic_predictor.1} parent=43 // pred_region
          %s345 = sand.u32 %s98, 1
          %s346 = scalar_lea.sflag [#allocation5], %s345
          %s347 = sand.u32 %s98, 1
          %s348 = scalar_lea.vmem [#allocation6], %s347
          %349 = dma.done %s346, 16
        $region48: #{aesthetic_predictor.1} parent=43 // pred_fallthru
          _
      $region44: #{aesthetic_predictor.1} parent=5 // pred_fallthru
        _
    $region6: #{aesthetic_predictor.1} parent=1 // loop_footer
      %s20 = sadd.s32 1, %s16
    $region7: #{aesthetic_predictor.1} parent=1 // loop_footer_branch
      %15 = sbr.rel target = $region3
    $region8: #{aesthetic_predictor.1} parent=1 // loop_exit
      _
    %350 = vsyncpa [#allocation4], 1
    %s351 = scalar_lea.sflag [#allocation4], 1
    %352 = vsyncpa %s351, 1
    %353 = vsyncpa [#allocation5], 1
    %s354 = scalar_lea.sflag [#allocation5], 1
    %355 = vsyncpa %s354, 1

</llo_original>
